<compile_context>
chip_gen: v6e
topology: v6e:2x2x1
jax: 0.10.0
libtpu: 0.0.40
codegen_flags: <defaults>
</compile_context>

<pallas_src>
import functools

import jax
import jax.numpy as jnp
from jax.experimental import pallas as pl
from jax.experimental.pallas import tpu as pltpu


# SDWPF-style column layout (the dataset this loss is written for).
COL_NAMES = {
    "TurbID": 0, "Wspd": 1, "Wdir": 2, "Etmp": 3, "Itmp": 4,
    "Ndir": 5, "Pab1": 6, "Pab2": 7, "Pab3": 8, "Prtv": 9, "Patv": 10,
}
NUM_FEATURES = len(COL_NAMES)

_LANE = 512           # lane-dense minor dim (multiple of 128)
_N_CORES = 2          # leading "parallel" grid axis (uses both TCs on v7x; serial elsewhere)
_ROW_ALIGN = 32       # int8 mask tile is (32, 128) -> block_rows % 32 == 0


def _cdiv(a, b):
    return -(-a // b)


def _round_up(a, b):
    return _cdiv(a, b) * b


def _filter_huber_kernel(pred_ref, gold_ref, mask_ref, out_ref, acc_ref,
                         *, beta, inv_2beta, block_rows, lane):
    i = pl.program_id(1)

    @pl.when(i == 0)
    def _init():
        acc_ref[...] = jnp.zeros_like(acc_ref)

    # smooth_l1_loss(pred, gold, reduction='none', beta=delta)
    diff = pred_ref[...] - gold_ref[...]
    adiff = jnp.abs(diff)
    huber = jnp.where(adiff < beta,
                      adiff * adiff * inv_2beta,   # 0.5 * d^2 / beta (folded)
                      adiff - 0.5 * beta)

    # 1-byte validity mask (1 = keep, 0 = filtered or padding).
    masked = jnp.where(mask_ref[...] != 0, huber, 0.0)

    # Fold the block's rows into a small (8, lane) accumulator (pure VALU adds,
    # no per-step cross-lane reduction, tiny acc VMEM / store traffic).
    acc_ref[...] = acc_ref[...] + jnp.sum(
        masked.reshape(block_rows // 8, 8, lane), axis=0)

    @pl.when(i == pl.num_programs(1) - 1)
    def _finalize():
        out_ref[...] = jnp.sum(acc_ref[...]).reshape(1, 1, 1)


def _valid_mask(raw, col_names):
    """Filter condition from the PyTorch module; returns bool 'keep' mask."""
    c = col_names
    wspd = raw[..., c["Wspd"]]
    wdir = raw[..., c["Wdir"]]
    ndir = raw[..., c["Ndir"]]
    patv = raw[..., c["Patv"]]
    cond1 = patv < 0
    cond2 = raw[..., c["Pab1"]] > 89
    cond2 = cond2 | (raw[..., c["Pab2"]] > 89)
    cond2 = cond2 | (raw[..., c["Pab3"]] > 89)
    cond2 = cond2 | (wdir < -180) | (wdir > 180)
    cond2 = cond2 | (ndir < -720) | (ndir > 720)
    cond2 = cond2 | cond1
    cond3 = (patv == 0) & (wspd > 2.5)
    cond3 = cond3 | cond2
    return jnp.logical_not(cond3)


def filter_huber_loss(pred, gold, raw, col_names=COL_NAMES, delta=5,
                      lane=_LANE, target_block_rows=1024):
    """pred, gold: (B, T, N) float; raw: (B, T, N, F) float. Returns scalar loss."""
    B, T, N = pred.shape
    M = B * T * N  # true element count for the mean

    pred_f = pred.reshape(M).astype(jnp.float32)
    gold_f = gold.reshape(M).astype(jnp.float32)
    # Precomputed 1-byte mask: one fused elementwise XLA op over `raw`; the
    # kernel then reads only pred + gold + mask (~9 B/elem HBM traffic).
    # NOTE: keep the filter inputs in f32 — exact comparisons (Patv == 0, etc.)
    mask_f = _valid_mask(raw, col_names).reshape(M).astype(jnp.int8)

    # Block sizing: choose block_rows first, then pad rows up to
    # n_cores * inner_blocks * block_rows (padding is mask=0 -> contributes 0).
    n_cores = _N_CORES
    rows_needed = _cdiv(M, lane)
    block_rows = min(int(target_block_rows),
                     _round_up(_cdiv(rows_needed, n_cores), _ROW_ALIGN))
    block_rows = _round_up(block_rows, _ROW_ALIGN)
    inner_blocks = _cdiv(rows_needed, n_cores * block_rows)
    rows = n_cores * inner_blocks * block_rows
    m_pad = rows * lane

    pad = m_pad - M
    if pad:
        pred_f = jnp.pad(pred_f, (0, pad))
        gold_f = jnp.pad(gold_f, (0, pad))
        mask_f = jnp.pad(mask_f, (0, pad))   # padding mask = 0 -> zero contribution

    pred2 = pred_f.reshape(rows, lane)
    gold2 = gold_f.reshape(rows, lane)
    mask2 = mask_f.reshape(rows, lane)

    kernel = functools.partial(
        _filter_huber_kernel,
        beta=float(delta),
        inv_2beta=0.5 / float(delta),
        block_rows=block_rows,
        lane=lane)

    def row_map(c, i):
        return (c * inner_blocks + i, 0)

    # Explicit VMEM budget: double-buffered pred/gold/mask tiles + acc + slack.
    block_bytes = block_rows * lane * (4 + 4 + 1)
    vmem_limit = 2 * block_bytes + 8 * lane * 4 + (4 << 20)

    cost = pl.CostEstimate(flops=10 * m_pad,
                           transcendentals=0,
                           bytes_accessed=9 * m_pad + 4 * n_cores)

    out = pl.pallas_call(
        kernel,
        out_shape=jax.ShapeDtypeStruct((n_cores, 1, 1), jnp.float32),
        grid_spec=pltpu.PrefetchScalarGridSpec(
            num_scalar_prefetch=0,
            grid=(n_cores, inner_blocks),
            in_specs=[
                pl.BlockSpec((block_rows, lane), row_map),   # pred
                pl.BlockSpec((block_rows, lane), row_map),   # gold
                pl.BlockSpec((block_rows, lane), row_map),   # mask (int8)
            ],
            out_specs=pl.BlockSpec((1, 1, 1), lambda c, i: (c, 0, 0)),
            scratch_shapes=[pltpu.VMEM((8, lane), jnp.float32)],
        ),
        compiler_params=pltpu.CompilerParams(
            dimension_semantics=("parallel", "arbitrary"),
            vmem_limit_bytes=int(vmem_limit)),
        cost_estimate=cost,
    )(pred2, gold2, mask2)

    # Sum the per-core partials and divide by the TRUE element count.
    return jnp.sum(out) / M


def filter_huber_loss_ref(pred, gold, raw, col_names=COL_NAMES, delta=5):
    """Plain-JAX reference mirroring the PyTorch forward."""
    cond = _valid_mask(raw, col_names).astype(jnp.float32)
    diff = jnp.abs(pred - gold)
    beta = jnp.float32(delta)
    huber = jnp.where(diff < beta, 0.5 * diff * diff / beta, diff - 0.5 * beta)
    return jnp.mean(huber * cond)


if __name__ == "__main__":
    # Small shapes: batch=2, time=8, turbines=16, features=11 -> M = 256.
    B, T, N, F = 2, 8, 16, NUM_FEATURES
    key = jax.random.PRNGKey(0)
    k_pred, k_gold, k_raw, k_wspd, k_wdir, k_ndir, k_pab, k_patv = (
        jax.random.split(key, 8))

    pred = 10.0 * jax.random.normal(k_pred, (B, T, N), dtype=jnp.float32)
    gold = 10.0 * jax.random.normal(k_gold, (B, T, N), dtype=jnp.float32)

    raw = jax.random.normal(k_raw, (B, T, N, F), dtype=jnp.float32)
    raw = raw.at[..., COL_NAMES["Wspd"]].set(
        jax.random.uniform(k_wspd, (B, T, N), minval=0.0, maxval=15.0))
    raw = raw.at[..., COL_NAMES["Wdir"]].set(
        jax.random.uniform(k_wdir, (B, T, N), minval=-220.0, maxval=220.0))
    raw = raw.at[..., COL_NAMES["Ndir"]].set(
        jax.random.uniform(k_ndir, (B, T, N), minval=-800.0, maxval=800.0))
    for name in ("Pab1", "Pab2", "Pab3"):
        k_pab, sub = jax.random.split(k_pab)
        raw = raw.at[..., COL_NAMES[name]].set(
            jax.random.uniform(sub, (B, T, N), minval=0.0, maxval=95.0))
    raw = raw.at[..., COL_NAMES["Patv"]].set(
        jax.random.uniform(k_patv, (B, T, N), minval=-20.0, maxval=300.0))
    # Force some exact-zero Patv rows to exercise the (Patv==0 & Wspd>2.5) branch.
    raw = raw.at[:, :, :4, COL_NAMES["Patv"]].set(0.0)

    out = filter_huber_loss(pred, gold, raw, COL_NAMES, delta=5)
    out = jax.block_until_ready(out)

    ref = filter_huber_loss_ref(pred, gold, raw, COL_NAMES, delta=5)
    assert jnp.allclose(out, ref, rtol=1e-5, atol=1e-5), (out, ref)

    print("KERNEL_OK")
</pallas_src>

<mosaic_0001>
module attributes {stable_mosaic.version = 11 : i64} {
  func.func @_filter_huber_kernel(%arg0: i32, %arg1: i32, %arg2: memref<32x512xf32, #tpu.memory_space<vmem>>, %arg3: memref<32x512xf32, #tpu.memory_space<vmem>>, %arg4: memref<32x512xi8, #tpu.memory_space<vmem>>, %arg5: memref<1x1x1xf32, #tpu.memory_space<vmem>>, %arg6: memref<8x512xf32, #tpu.memory_space<vmem>>) attributes {dimension_semantics = [#tpu.dimension_semantics<parallel>, #tpu.dimension_semantics<arbitrary>], iteration_bounds = array<i64: 2, 1>, scalar_prefetch = 0 : i64, scratch_operands = 1 : i64, tpu.core_type = #tpu.core_type<tc>, window_params = [{transform_indices = @transform_0, window_bounds = array<i64: 32, 512>}, {transform_indices = @transform_1, window_bounds = array<i64: 32, 512>}, {transform_indices = @transform_2, window_bounds = array<i64: 32, 512>}, {transform_indices = @transform_3, window_bounds = array<i64: 1, 1, 1>}]} {
    %c0_i32 = arith.constant 0 : i32
    %0 = arith.cmpi eq, %arg1, %c0_i32 : i32
    %1 = arith.extui %0 : i1 to i32
    %c0_i32_0 = arith.constant 0 : i32
    %2 = arith.cmpi ne, %1, %c0_i32_0 : i32
    scf.if %2 {
      %cst_16 = arith.constant 0.000000e+00 : f32
      %28 = vector.broadcast %cst_16 : f32 to vector<8x512xf32>
      %c0_17 = arith.constant 0 : index
      %c0_18 = arith.constant 0 : index
      %29 = vector.load %arg6[%c0_17, %c0_18] : memref<8x512xf32, #tpu.memory_space<vmem>>, vector<8x512xf32>
      tpu.vector_store %arg6[%c0_17, %c0_18], %28 {strides = array<i32>} : memref<8x512xf32, #tpu.memory_space<vmem>>, vector<8x512xf32>,
    } else {
    }
    %c0 = arith.constant 0 : index
    %c0_1 = arith.constant 0 : index
    %3 = vector.load %arg2[%c0, %c0_1] : memref<32x512xf32, #tpu.memory_space<vmem>>, vector<32x512xf32>
    %c0_2 = arith.constant 0 : index
    %c0_3 = arith.constant 0 : index
    %4 = vector.load %arg3[%c0_2, %c0_3] : memref<32x512xf32, #tpu.memory_space<vmem>>, vector<32x512xf32>
    %5 = arith.subf %3, %4 : vector<32x512xf32>
    %6 = math.absf %5 : vector<32x512xf32>
    %cst = arith.constant 5.000000e+00 : f32
    %7 = vector.broadcast %cst : f32 to vector<32x512xf32>
    %8 = arith.cmpf olt, %6, %7 : vector<32x512xf32>
    %9 = arith.mulf %6, %6 : vector<32x512xf32>
    %cst_4 = arith.constant 1.000000e-01 : f32
    %10 = vector.broadcast %cst_4 : f32 to vector<32x512xf32>
    %11 = arith.mulf %9, %10 : vector<32x512xf32>
    %cst_5 = arith.constant 2.500000e+00 : f32
    %12 = vector.broadcast %cst_5 : f32 to vector<32x512xf32>
    %13 = arith.subf %6, %12 : vector<32x512xf32>
    %14 = arith.select %8, %11, %13 : vector<32x512xi1>, vector<32x512xf32>
    %c0_6 = arith.constant 0 : index
    %c0_7 = arith.constant 0 : index
    %15 = vector.load %arg4[%c0_6, %c0_7] : memref<32x512xi8, #tpu.memory_space<vmem>>, vector<32x512xi8>
    %c0_i8 = arith.constant 0 : i8
    %16 = vector.broadcast %c0_i8 : i8 to vector<32x512xi8>
    %17 = arith.cmpi ne, %15, %16 : vector<32x512xi8>
    %cst_8 = arith.constant 0.000000e+00 : f32
    %18 = vector.broadcast %cst_8 : f32 to vector<32x512xf32>
    %19 = arith.select %17, %14, %18 : vector<32x512xi1>, vector<32x512xf32>
    %c0_9 = arith.constant 0 : index
    %c0_10 = arith.constant 0 : index
    %20 = vector.load %arg6[%c0_9, %c0_10] : memref<8x512xf32, #tpu.memory_space<vmem>>, vector<8x512xf32>
    %21 = vector.shape_cast %19 : vector<32x512xf32> to vector<4x8x512xf32>
    %cst_11 = arith.constant dense<0.000000e+00> : vector<8x512xf32>
    %22 = vector.multi_reduction <add>, %21, %cst_11 [0] : vector<4x8x512xf32> to vector<8x512xf32>
    %23 = arith.addf %20, %22 : vector<8x512xf32>
    %c0_12 = arith.constant 0 : index
    %c0_13 = arith.constant 0 : index
    %24 = vector.load %arg6[%c0_12, %c0_13] : memref<8x512xf32, #tpu.memory_space<vmem>>, vector<8x512xf32>
    tpu.vector_store %arg6[%c0_12, %c0_13], %23 {strides = array<i32>} : memref<8x512xf32, #tpu.memory_space<vmem>>, vector<8x512xf32>,
    %c0_i32_14 = arith.constant 0 : i32
    %25 = arith.cmpi eq, %arg1, %c0_i32_14 : i32
    %26 = arith.extui %25 : i1 to i32
    %c0_i32_15 = arith.constant 0 : i32
    %27 = arith.cmpi ne, %26, %c0_i32_15 : i32
    scf.if %27 {
      %c0_16 = arith.constant 0 : index
      %c0_17 = arith.constant 0 : index
      %28 = vector.load %arg6[%c0_16, %c0_17] : memref<8x512xf32, #tpu.memory_space<vmem>>, vector<8x512xf32>
      %29 = vector.shape_cast %28 : vector<8x512xf32> to vector<1x8x512xf32>
      %cst_18 = arith.constant dense<0.000000e+00> : vector<1xf32>
      %30 = vector.multi_reduction <add>, %29, %cst_18 [1, 2] : vector<1x8x512xf32> to vector<1xf32>
      %31 = vector.shape_cast %30 : vector<1xf32> to vector<1x1x1xf32>
      %32 = vector.extract %31[0, 0, 0] : f32 from vector<1x1x1xf32>
      %33 = vector.broadcast %32 : f32 to vector<1x1x1xf32>
      %c0_19 = arith.constant 0 : index
      %c0_20 = arith.constant 0 : index
      %c0_21 = arith.constant 0 : index
      %34 = vector.load %arg5[%c0_19, %c0_20, %c0_21] : memref<1x1x1xf32, #tpu.memory_space<vmem>>, vector<1x1x1xf32>
      tpu.vector_store %arg5[%c0_19, %c0_20, %c0_21], %33 {strides = array<i32>} : memref<1x1x1xf32, #tpu.memory_space<vmem>>, vector<1x1x1xf32>,
    } else {
    }
    return
  }
  func.func @transform_0(%arg0: i32, %arg1: i32) -> (i32, i32) {
    %c1_i32 = arith.constant 1 : i32
    %0 = arith.muli %arg0, %c1_i32 : i32
    %1 = arith.addi %0, %arg1 : i32
    %c0_i32 = arith.constant 0 : i32
    %c0_i32_0 = arith.constant 0 : i32
    return %1, %c0_i32 : i32, i32
  }
  func.func @transform_1(%arg0: i32, %arg1: i32) -> (i32, i32) {
    %c1_i32 = arith.constant 1 : i32
    %0 = arith.muli %arg0, %c1_i32 : i32
    %1 = arith.addi %0, %arg1 : i32
    %c0_i32 = arith.constant 0 : i32
    %c0_i32_0 = arith.constant 0 : i32
    return %1, %c0_i32 : i32, i32
  }
  func.func @transform_2(%arg0: i32, %arg1: i32) -> (i32, i32) {
    %c1_i32 = arith.constant 1 : i32
    %0 = arith.muli %arg0, %c1_i32 : i32
    %1 = arith.addi %0, %arg1 : i32
    %c0_i32 = arith.constant 0 : i32
    %c0_i32_0 = arith.constant 0 : i32
    return %1, %c0_i32 : i32, i32
  }
  func.func @transform_3(%arg0: i32, %arg1: i32) -> (i32, i32, i32) {
    %c0_i32 = arith.constant 0 : i32
    %c0_i32_0 = arith.constant 0 : i32
    %c0_i32_1 = arith.constant 0 : i32
    return %arg0, %c0_i32, %c0_i32_0 : i32, i32, i32
  }
}

</mosaic_0001>

<llo_original>
// kernel: tpu_custom_call.1
$region0: #{tpu_custom_call.1}
  #allocation0 [shape = 'u32[]', space=smem, size = 0x4, offset = 0x4, fixed_abs, tag = 'smem constant byte address 0x4 - core index']
  #allocation1 [shape = 'u32[144,128]{1,0:T(1,128)}', space=vmem, size = 0x12000, scoped, tag = 'internal scratch']
  #allocation2 [shape = 'f32[8,512]{1,0:T(8,128)}', space=vmem, size = 0x4000, scoped, tag = 'scratch operand']
  %s0 = inlined_call_operand.hbm [shape: f32[64,512], index: 0, kind: input, shape index: {}]
  %s1 = inlined_call_operand.hbm [shape: f32[64,512], index: 1, kind: input, shape index: {}]
  %s2 = inlined_call_operand.hbm [shape: s8[64,512], index: 2, kind: input, shape index: {}]
  %s3 = inlined_call_operand.vmem [shape: f32[2,1,1], index: 3, kind: output, shape index: {}]
  %s4 = sld [smem:[#allocation0]]
  $region65: #{tpu_custom_call.1} parent=0
    _
  %s6 = ssub.s32 1, %s4
  %s7 = scalar_select 0, %s6, %s4
  $region1: #{tpu_custom_call.1} parent=0
    #allocation3 [shape = 'u8[131072]{0}', space=vmem, size = 0x20000, scoped, tag = 'input window, operand 0']
    #allocation4 [shape = 's32[2]{0}', space=sflag, size = 0x8, scoped, tag = 'scoped memory for tpu_custom_call.1']
    #allocation5 [shape = 'u8[131072]{0}', space=vmem, size = 0x20000, scoped, tag = 'input window, operand 1']
    #allocation6 [shape = 's32[2]{0}', space=sflag, size = 0x8, scoped, tag = 'scoped memory for tpu_custom_call.1']
    #allocation7 [shape = 'u8[32768]{0}', space=vmem, size = 0x8000, scoped, tag = 'input window, operand 2']
    %8 = vsyncpa [#allocation4], 0
    %s9 = scalar_lea.sflag [#allocation4], 1
    %10 = vsyncpa %s9, 0
    %11 = vsyncpa [#allocation6], 0
    %s12 = scalar_lea.sflag [#allocation6], 1
    %13 = vsyncpa %s12, 0
    loop: start=0, step=1, limit=4
    $region2: #{tpu_custom_call.1} parent=1 // loop_pre_header
      _
    $region3: #{tpu_custom_call.1} parent=1 // loop_header
      %s15 = sphi 0, %s19
      %p16 = scmp.ge.s32.totalorder %s15, 4
      %s22 = sphi 0, %s34
      %s23 = sphi 0, %s30
      %s24 = sphi 0, %s22
      %s25 = sphi 0, %s23
      %s26 = sphi 0, %s24
      %s27 = sphi 0, %s25
      %s39 = sphi 0, %s41
      %s42 = sphi 0, %s39
      %s43 = sphi 0, %s42
      %s59 = sphi 0, %s43
      %s67 = sphi 0, %s69
      %s70 = sphi 0, %s67
      %s71 = sphi 0, %s70
      %s87 = sphi 0, %s71
      %s95 = sphi 0, %s97
      %s98 = sphi 0, %s95
      %s99 = sphi 0, %s98
      %s115 = sphi 0, %s99
      %s121 = sphi 0, %s123
      %s124 = sphi 0, %s121
      %s125 = sphi 0, %s124
      %s141 = sphi 0, %s125
    $region4: #{tpu_custom_call.1} parent=1 // loop_header_branch
      %18 = sbr.rel (%p16) target = $region8
    $region5: #{tpu_custom_call.1} parent=1 // loop_body
      %s20 = ssub.s32 %s15, 1
      %s21 = ssub.s32 %s15, 2
      %s28 = sadd.s32 1, %s23
      %p29 = scmp.ge.s32.totalorder %s28, 1
      %s30 = scalar_select %p29, 0, %s28
      %s31 = sadd.s32 1, %s22
      %s32 = scalar_select %p29, %s31, %s22
      %p33 = scmp.ge.s32.totalorder %s32, 2
      %s34 = scalar_select %p33, 0, %s32
      %s35 = sadd.s32 %s22, %s23
      %s36 = sadd.s32 %s34, %s30
      %s37 = ssub.s32 %s35, %s36
      %p38 = scmp.eq.s32.totalorder %s37, 0
      %s40 = sadd.s32 %s39, 1
      %s41 = scalar_select %p38, %s39, %s40
      %p44 = pneg %p38
      %p45 = scmp.eq.s32.totalorder %s15, 1
      %p46 = por %p44, %p45
      %p47 = scmp.ne.s32.totalorder %s39, %s42
      %p48 = scmp.eq.s32.totalorder %s15, 0
      %p49 = por %p47, %p48
      %p50 = scmp.ne.s32.totalorder %s39, %s42
      %p51 = scmp.eq.s32.totalorder %s20, 1
      %p52 = por %p50, %p51
      %p53 = scmp.ne.s32.totalorder %s42, %s43
      %p54 = scmp.eq.s32.totalorder %s20, 0
      %p55 = por %p53, %p54
      %p56 = scmp.ne.s32.totalorder %s42, %s43
      %p57 = scmp.eq.s32.totalorder %s21, 1
      %p58 = por %p56, %p57
      %p60 = scmp.ne.s32.totalorder %s43, %s59
      %p61 = scmp.eq.s32.totalorder %s21, 0
      %p62 = por %p60, %p61
      %s63 = sadd.s32 %s22, %s23
      %s64 = sadd.s32 %s34, %s30
      %s65 = ssub.s32 %s63, %s64
      %p66 = scmp.eq.s32.totalorder %s65, 0
      %s68 = sadd.s32 %s67, 1
      %s69 = scalar_select %p66, %s67, %s68
      %p72 = pneg %p66
      %p73 = scmp.eq.s32.totalorder %s15, 1
      %p74 = por %p72, %p73
      %p75 = scmp.ne.s32.totalorder %s67, %s70
      %p76 = scmp.eq.s32.totalorder %s15, 0
      %p77 = por %p75, %p76
      %p78 = scmp.ne.s32.totalorder %s67, %s70
      %p79 = scmp.eq.s32.totalorder %s20, 1
      %p80 = por %p78, %p79
      %p81 = scmp.ne.s32.totalorder %s70, %s71
      %p82 = scmp.eq.s32.totalorder %s20, 0
      %p83 = por %p81, %p82
      %p84 = scmp.ne.s32.totalorder %s70, %s71
      %p85 = scmp.eq.s32.totalorder %s21, 1
      %p86 = por %p84, %p85
      %p88 = scmp.ne.s32.totalorder %s71, %s87
      %p89 = scmp.eq.s32.totalorder %s21, 0
      %p90 = por %p88, %p89
      %s91 = sadd.s32 %s22, %s23
      %s92 = sadd.s32 %s34, %s30
      %s93 = ssub.s32 %s91, %s92
      %p94 = scmp.eq.s32.totalorder %s93, 0
      %s96 = sadd.s32 %s95, 1
      %s97 = scalar_select %p94, %s95, %s96
      %p100 = pneg %p94
      %p101 = scmp.eq.s32.totalorder %s15, 1
      %p102 = por %p100, %p101
      %p103 = scmp.ne.s32.totalorder %s95, %s98
      %p104 = scmp.eq.s32.totalorder %s15, 0
      %p105 = por %p103, %p104
      %p106 = scmp.ne.s32.totalorder %s95, %s98
      %p107 = scmp.eq.s32.totalorder %s20, 1
      %p108 = por %p106, %p107
      %p109 = scmp.ne.s32.totalorder %s98, %s99
      %p110 = scmp.eq.s32.totalorder %s20, 0
      %p111 = por %p109, %p110
      %p112 = scmp.ne.s32.totalorder %s98, %s99
      %p113 = scmp.eq.s32.totalorder %s21, 1
      %p114 = por %p112, %p113
      %p116 = scmp.ne.s32.totalorder %s99, %s115
      %p117 = scmp.eq.s32.totalorder %s21, 0
      %p118 = por %p116, %p117
      %s119 = ssub.s32 %s22, %s34
      %p120 = scmp.eq.s32.totalorder %s119, 0
      %s122 = sadd.s32 %s121, 1
      %s123 = scalar_select %p120, %s121, %s122
      %p126 = pneg %p120
      %p127 = scmp.eq.s32.totalorder %s15, 1
      %p128 = por %p126, %p127
      %p129 = scmp.ne.s32.totalorder %s121, %s124
      %p130 = scmp.eq.s32.totalorder %s15, 0
      %p131 = por %p129, %p130
      %p132 = scmp.ne.s32.totalorder %s121, %s124
      %p133 = scmp.eq.s32.totalorder %s20, 1
      %p134 = por %p132, %p133
      %p135 = scmp.ne.s32.totalorder %s124, %s125
      %p136 = scmp.eq.s32.totalorder %s20, 0
      %p137 = por %p135, %p136
      %p138 = scmp.ne.s32.totalorder %s124, %s125
      %p139 = scmp.eq.s32.totalorder %s21, 1
      %p140 = por %p138, %p139
      %p142 = scmp.ne.s32.totalorder %s125, %s141
      %p143 = scmp.eq.s32.totalorder %s21, 0
      %p144 = por %p142, %p143
      %p145 = scmp.le.s32.totalorder 1, %s15
      %p146 = scmp.lt.s32.totalorder %s15, 3
      %p147 = pnand %p145, %p146
      %p148 = pneg %p147
      // Predicated region
      $region9: #{tpu_custom_call.1} parent=5 // pred_check
        _
      $region10: #{tpu_custom_call.1} parent=5 // pred_check_branch
        %150 = sbr.rel (%p147) target = $region12
      $region11: #{tpu_custom_call.1} parent=5 // pred_region
        %s151 = ssub.s32 %s15, 1
      $region12: #{tpu_custom_call.1} parent=5 // pred_fallthru
        _
      %p152 = scmp.lt.s32.totalorder %s15, 2
      // Predicated region
      $region13: #{tpu_custom_call.1} parent=5 // pred_check
        %p153 = pneg %p152
      $region14: #{tpu_custom_call.1} parent=5 // pred_check_branch
        %155 = sbr.rel (%p153) target = $region16
      $region15: #{tpu_custom_call.1} parent=5 // pred_region
        // Predicated region
        $region17: #{tpu_custom_call.1} parent=15 // pred_check
          %p156 = pneg %p49
        $region18: #{tpu_custom_call.1} parent=15 // pred_check_branch
          %158 = sbr.rel (%p156) target = $region20
        $region19: #{tpu_custom_call.1} parent=15 // pred_region
          %s159 = sand.u32 %s39, 1
          %s160 = scalar_lea.sflag [#allocation4], %s159
          %s161 = sand.u32 %s39, 1
          %s162 = smul.addr %s161, 128
          %s163 = scalar_lea.vmem [#allocation3], %s162
          %s164 = sadd.s32 %s22, %s23
          %s165 = smul.u32 4, %s164
          %s167 = ssub.s32 2048, 2048
          %168 = vsyncadd %s160, %s167
          %s169 = smul.addr %s165, 4
          %s170 = smul.addr %s169, 128
          %s171 = scalar_lea.hbm %s0, %s170
          %s172 = sshll.u32 %s163, 4
          %s173 = int_to_ptr.vmem [resolvable:$true] %s172
          %178 = dma.hbm_to_vmem [thread:$0]  %s171, 2048, %s173, %s160, 512, 512, 32
        $region20: #{tpu_custom_call.1} parent=15 // pred_fallthru
          _
        // Predicated region
        $region21: #{tpu_custom_call.1} parent=15 // pred_check
          %p179 = pneg %p77
        $region22: #{tpu_custom_call.1} parent=15 // pred_check_branch
          %181 = sbr.rel (%p179) target = $region24
        $region23: #{tpu_custom_call.1} parent=15 // pred_region
          %s182 = sand.u32 %s15, 1
          %s183 = scalar_lea.sflag [#allocation6], %s182
          %s184 = sand.u32 %s67, 1
          %s185 = smul.addr %s184, 128
          %s186 = scalar_lea.vmem [#allocation5], %s185
          %s187 = sadd.s32 %s22, %s23
          %s188 = smul.u32 4, %s187
          %s190 = ssub.s32 2048, 2048
          %191 = vsyncadd %s183, %s190
          %s192 = smul.addr %s188, 4
          %s193 = smul.addr %s192, 128
          %s194 = scalar_lea.hbm %s1, %s193
          %s195 = sshll.u32 %s186, 4
          %s196 = int_to_ptr.vmem [resolvable:$true] %s195
          %201 = dma.hbm_to_vmem [thread:$0]  %s194, 2048, %s196, %s183, 512, 512, 32
        $region24: #{tpu_custom_call.1} parent=15 // pred_fallthru
          _
        // Predicated region
        $region25: #{tpu_custom_call.1} parent=15 // pred_check
          %p202 = pneg %p105
        $region26: #{tpu_custom_call.1} parent=15 // pred_check_branch
          %204 = sbr.rel (%p202) target = $region28
        $region27: #{tpu_custom_call.1} parent=15 // pred_region
          %s205 = sand.u32 %s15, 1
          %s206 = scalar_lea.sflag [#allocation6], %s205
          %s207 = sand.u32 %s95, 1
          %s208 = smul.addr %s207, 32
          %s209 = scalar_lea.vmem [#allocation7], %s208
          %s210 = sadd.s32 %s22, %s23
          %s212 = ssub.s32 512, 512
          %213 = vsyncadd %s206, %s212
          %s214 = smul.addr %s210, 4
          %s215 = smul.addr %s214, 128
          %s216 = scalar_lea.hbm %s2, %s215
          %s218 = sshll.u32 %s209, 4
          %s219 = int_to_ptr.vmem [resolvable:$true] %s218
          %221 = dma.hbm_to_vmem [thread:$0]  %s216, 512, %s219, %s206
        $region28: #{tpu_custom_call.1} parent=15 // pred_fallthru
          _
      $region16: #{tpu_custom_call.1} parent=5 // pred_fallthru
        _
      %p222 = scmp.le.s32.totalorder 1, %s15
      %p223 = scmp.lt.s32.totalorder %s15, 3
      %p224 = pnand %p222, %p223
      %p225 = pneg %p224
      // Predicated region
      $region29: #{tpu_custom_call.1} parent=5 // pred_check
        _
      $region30: #{tpu_custom_call.1} parent=5 // pred_check_branch
        %227 = sbr.rel (%p224) target = $region32
      $region31: #{tpu_custom_call.1} parent=5 // pred_region
        %s228 = ssub.s32 %s15, 1
        %s229 = sand.u32 %s42, 1
        %s230 = scalar_lea.sflag [#allocation4], %s229
        %s231 = sand.u32 %s42, 1
        %s232 = smul.addr %s231, 128
        %s233 = scalar_lea.vmem [#allocation3], %s232
        // Predicated region
        $region33: #{tpu_custom_call.1} parent=31 // pred_check
          %p234 = pneg %p55
        $region34: #{tpu_custom_call.1} parent=31 // pred_check_branch
          %236 = sbr.rel (%p234) target = $region36
        $region35: #{tpu_custom_call.1} parent=31 // pred_region
          %237 = dma.done %s230, 2048
        $region36: #{tpu_custom_call.1} parent=31 // pred_fallthru
          _
        %s238 = sand.u32 %s20, 1
        %s239 = scalar_lea.sflag [#allocation6], %s238
        %s240 = sand.u32 %s70, 1
        %s241 = smul.addr %s240, 128
        %s242 = scalar_lea.vmem [#allocation5], %s241
        // Predicated region
        $region37: #{tpu_custom_call.1} parent=31 // pred_check
          %p243 = pneg %p83
        $region38: #{tpu_custom_call.1} parent=31 // pred_check_branch
          %245 = sbr.rel (%p243) target = $region40
        $region39: #{tpu_custom_call.1} parent=31 // pred_region
          %246 = dma.done %s239, 2048
        $region40: #{tpu_custom_call.1} parent=31 // pred_fallthru
          _
        %s247 = sand.u32 %s20, 1
        %s248 = scalar_lea.sflag [#allocation6], %s247
        %s249 = sand.u32 %s98, 1
        %s250 = smul.addr %s249, 32
        %s251 = scalar_lea.vmem [#allocation7], %s250
        // Predicated region
        $region41: #{tpu_custom_call.1} parent=31 // pred_check
          %p252 = pneg %p111
        $region42: #{tpu_custom_call.1} parent=31 // pred_check_branch
          %254 = sbr.rel (%p252) target = $region44
        $region43: #{tpu_custom_call.1} parent=31 // pred_region
          %255 = dma.done %s248, 512
        $region44: #{tpu_custom_call.1} parent=31 // pred_fallthru
          _
        %s256 = sand.u32 %s42, 1
        %s257 = scalar_lea.sflag [#allocation4], %s256
        %s258 = sand.u32 %s42, 1
        %s259 = smul.addr %s258, 128
        %s260 = scalar_lea.vmem [#allocation3], %s259
        %p261 = pneg %p55
        %p262 = pneg %p52
        %s263 = sand.u32 %s20, 1
        %s264 = scalar_lea.sflag [#allocation6], %s263
        %s265 = sand.u32 %s70, 1
        %s266 = smul.addr %s265, 128
        %s267 = scalar_lea.vmem [#allocation5], %s266
        %p268 = pneg %p83
        %p269 = pneg %p80
        %s270 = sand.u32 %s20, 1
        %s271 = scalar_lea.sflag [#allocation6], %s270
        %s272 = sand.u32 %s98, 1
        %s273 = smul.addr %s272, 32
        %s274 = scalar_lea.vmem [#allocation7], %s273
        %p275 = pneg %p111
        %p276 = pneg %p108
        %p277 = pneg %p137
        %p278 = pneg %p134
        %p279 = scmp.lt.s32.totalorder %s24, 1
        %s280 = scalar_select %p279, %s24, 1
        %s281 = scalar_lea.vmem %s3, %s280
        %s282 = sadd.s32 %s24, %s25
        %s283 = smul.u32 4, %s282
        %s284 = sadd.s32 %s24, %s25
        %s285 = smul.u32 4, %s284
        %s286 = sadd.s32 %s24, %s25
        %p287 = scmp.lt.s32.totalorder %s24, 1
        %s288 = scalar_select %p287, %s24, 1
        %s289 = scalar_lea.vmem %s3, %s288
        %p292 = scmp.eq.s32.totalorder %s25, 0
        // Predicated region
        $region45: #{tpu_custom_call.1} parent=31 // pred_check
          %p293 = pneg %p292
        $region46: #{tpu_custom_call.1} parent=31 // pred_check_branch
          %295 = sbr.rel (%p293) target = $region48
        $region47: #{tpu_custom_call.1} parent=31 // pred_region
          %296 = vst [vmem:[#allocation2] sm:$0xff] 0.0
          %297 = vst [vmem:[#allocation2 + $0x8] sm:$0xff] 0.0
          %298 = vst [vmem:[#allocation2 + $0x10] sm:$0xff] 0.0
          %299 = vst [vmem:[#allocation2 + $0x18] sm:$0xff] 0.0
        $region48: #{tpu_custom_call.1} parent=31 // pred_fallthru
          _
        %v300 = vld [vmem:[%s233] sm:$0xff]
        %v301 = vld [vmem:[%s233 + $0x8] sm:$0xff]
        %v302 = vld [vmem:[%s233 + $0x10] sm:$0xff]
        %v303 = vld [vmem:[%s233 + $0x18] sm:$0xff]
        %v304 = vld [vmem:[%s233 + $0x20] sm:$0xff]
        %v305 = vld [vmem:[%s233 + $0x28] sm:$0xff]
        %v306 = vld [vmem:[%s233 + $0x30] sm:$0xff]
        %v307 = vld [vmem:[%s233 + $0x38] sm:$0xff]
        %v308 = vld [vmem:[%s233 + $0x40] sm:$0xff]
        %v309 = vld [vmem:[%s233 + $0x48] sm:$0xff]
        %v310 = vld [vmem:[%s233 + $0x50] sm:$0xff]
        %v311 = vld [vmem:[%s233 + $0x58] sm:$0xff]
        %v312 = vld [vmem:[%s233 + $0x60] sm:$0xff]
        %v313 = vld [vmem:[%s233 + $0x68] sm:$0xff]
        %v314 = vld [vmem:[%s233 + $0x70] sm:$0xff]
        %v315 = vld [vmem:[%s233 + $0x78] sm:$0xff]
        %v316 = vld [vmem:[%s242] sm:$0xff]
        %v317 = vld [vmem:[%s242 + $0x8] sm:$0xff]
        %v318 = vld [vmem:[%s242 + $0x10] sm:$0xff]
        %v319 = vld [vmem:[%s242 + $0x18] sm:$0xff]
        %v320 = vld [vmem:[%s242 + $0x20] sm:$0xff]
        %v321 = vld [vmem:[%s242 + $0x28] sm:$0xff]
        %v322 = vld [vmem:[%s242 + $0x30] sm:$0xff]
        %v323 = vld [vmem:[%s242 + $0x38] sm:$0xff]
        %v324 = vld [vmem:[%s242 + $0x40] sm:$0xff]
        %v325 = vld [vmem:[%s242 + $0x48] sm:$0xff]
        %v326 = vld [vmem:[%s242 + $0x50] sm:$0xff]
        %v327 = vld [vmem:[%s242 + $0x58] sm:$0xff]
        %v328 = vld [vmem:[%s242 + $0x60] sm:$0xff]
        %v329 = vld [vmem:[%s242 + $0x68] sm:$0xff]
        %v330 = vld [vmem:[%s242 + $0x70] sm:$0xff]
        %v331 = vld [vmem:[%s242 + $0x78] sm:$0xff]
        %v332 = vsub.f32 %v300, %v316
        %v333 = vsub.f32 %v301, %v317
        %v334 = vsub.f32 %v302, %v318
        %v335 = vsub.f32 %v303, %v319
        %v336 = vsub.f32 %v304, %v320
        %v337 = vsub.f32 %v305, %v321
        %v338 = vsub.f32 %v306, %v322
        %v339 = vsub.f32 %v307, %v323
        %v340 = vsub.f32 %v308, %v324
        %v341 = vsub.f32 %v309, %v325
        %v342 = vsub.f32 %v310, %v326
        %v343 = vsub.f32 %v311, %v327
        %v344 = vsub.f32 %v312, %v328
        %v345 = vsub.f32 %v313, %v329
        %v346 = vsub.f32 %v314, %v330
        %v347 = vsub.f32 %v315, %v331
        %v348 = vand.u32 2147483647, %v332
        %v349 = vand.u32 2147483647, %v333
        %v350 = vand.u32 2147483647, %v334
        %v351 = vand.u32 2147483647, %v335
        %v352 = vand.u32 2147483647, %v336
        %v353 = vand.u32 2147483647, %v337
        %v354 = vand.u32 2147483647, %v338
        %v355 = vand.u32 2147483647, %v339
        %v356 = vand.u32 2147483647, %v340
        %v357 = vand.u32 2147483647, %v341
        %v358 = vand.u32 2147483647, %v342
        %v359 = vand.u32 2147483647, %v343
        %v360 = vand.u32 2147483647, %v344
        %v361 = vand.u32 2147483647, %v345
        %v362 = vand.u32 2147483647, %v346
        %v363 = vand.u32 2147483647, %v347
        %vm364 = vcmp.lt.f32.partialorder %v348, 5.0
        %vm365 = vcmp.lt.f32.partialorder %v349, 5.0
        %vm366 = vcmp.lt.f32.partialorder %v350, 5.0
        %vm367 = vcmp.lt.f32.partialorder %v351, 5.0
        %vm368 = vcmp.lt.f32.partialorder %v352, 5.0
        %vm369 = vcmp.lt.f32.partialorder %v353, 5.0
        %vm370 = vcmp.lt.f32.partialorder %v354, 5.0
        %vm371 = vcmp.lt.f32.partialorder %v355, 5.0
        %vm372 = vcmp.lt.f32.partialorder %v356, 5.0
        %vm373 = vcmp.lt.f32.partialorder %v357, 5.0
        %vm374 = vcmp.lt.f32.partialorder %v358, 5.0
        %vm375 = vcmp.lt.f32.partialorder %v359, 5.0
        %vm376 = vcmp.lt.f32.partialorder %v360, 5.0
        %vm377 = vcmp.lt.f32.partialorder %v361, 5.0
        %vm378 = vcmp.lt.f32.partialorder %v362, 5.0
        %vm379 = vcmp.lt.f32.partialorder %v363, 5.0
        %v380 = vmul.f32 %v348, %v348
        %v381 = vmul.f32 %v349, %v349
        %v382 = vmul.f32 %v350, %v350
        %v383 = vmul.f32 %v351, %v351
        %v384 = vmul.f32 %v352, %v352
        %v385 = vmul.f32 %v353, %v353
        %v386 = vmul.f32 %v354, %v354
        %v387 = vmul.f32 %v355, %v355
        %v388 = vmul.f32 %v356, %v356
        %v389 = vmul.f32 %v357, %v357
        %v390 = vmul.f32 %v358, %v358
        %v391 = vmul.f32 %v359, %v359
        %v392 = vmul.f32 %v360, %v360
        %v393 = vmul.f32 %v361, %v361
        %v394 = vmul.f32 %v362, %v362
        %v395 = vmul.f32 %v363, %v363
        %v396 = vmul.f32 %v380, 0.1
        %v397 = vmul.f32 %v381, 0.1
        %v398 = vmul.f32 %v382, 0.1
        %v399 = vmul.f32 %v383, 0.1
        %v400 = vmul.f32 %v384, 0.1
        %v401 = vmul.f32 %v385, 0.1
        %v402 = vmul.f32 %v386, 0.1
        %v403 = vmul.f32 %v387, 0.1
        %v404 = vmul.f32 %v388, 0.1
        %v405 = vmul.f32 %v389, 0.1
        %v406 = vmul.f32 %v390, 0.1
        %v407 = vmul.f32 %v391, 0.1
        %v408 = vmul.f32 %v392, 0.1
        %v409 = vmul.f32 %v393, 0.1
        %v410 = vmul.f32 %v394, 0.1
        %v411 = vmul.f32 %v395, 0.1
        %v412 = vsub.f32 %v348, 2.5
        %v413 = vsub.f32 %v349, 2.5
        %v414 = vsub.f32 %v350, 2.5
        %v415 = vsub.f32 %v351, 2.5
        %v416 = vsub.f32 %v352, 2.5
        %v417 = vsub.f32 %v353, 2.5
        %v418 = vsub.f32 %v354, 2.5
        %v419 = vsub.f32 %v355, 2.5
        %v420 = vsub.f32 %v356, 2.5
        %v421 = vsub.f32 %v357, 2.5
        %v422 = vsub.f32 %v358, 2.5
        %v423 = vsub.f32 %v359, 2.5
        %v424 = vsub.f32 %v360, 2.5
        %v425 = vsub.f32 %v361, 2.5
        %v426 = vsub.f32 %v362, 2.5
        %v427 = vsub.f32 %v363, 2.5
        %v428 = vsel %vm364, %v396, %v412
        %v429 = vsel %vm365, %v397, %v413
        %v430 = vsel %vm366, %v398, %v414
        %v431 = vsel %vm367, %v399, %v415
        %v432 = vsel %vm368, %v400, %v416
        %v433 = vsel %vm369, %v401, %v417
        %v434 = vsel %vm370, %v402, %v418
        %v435 = vsel %vm371, %v403, %v419
        %v436 = vsel %vm372, %v404, %v420
        %v437 = vsel %vm373, %v405, %v421
        %v438 = vsel %vm374, %v406, %v422
        %v439 = vsel %vm375, %v407, %v423
        %v440 = vsel %vm376, %v408, %v424
        %v441 = vsel %vm377, %v409, %v425
        %v442 = vsel %vm378, %v410, %v426
        %v443 = vsel %vm379, %v411, %v427
        %v444 = vld [vmem:[%s251] sm:$0xff]
        %v445 = vld [vmem:[%s251 + $0x8] sm:$0xff]
        %v446 = vld [vmem:[%s251 + $0x10] sm:$0xff]
        %v447 = vld [vmem:[%s251 + $0x18] sm:$0xff]
        %vm448 = vnez %v444
        %vm449 = vnez %v445
        %vm450 = vnez %v446
        %vm451 = vnez %v447
        %v452 = vsel %vm448, 16843009, 0
        %v453 = vsel %vm449, 16843009, 0
        %v454 = vsel %vm450, 16843009, 0
        %v455 = vsel %vm451, 16843009, 0
        %v456 = vunpack.c.0.s8 %v452
        %v457 = vunpack.c.0.s8 %v453
        %v458 = vunpack.c.0.s8 %v454
        %v459 = vunpack.c.0.s8 %v455
        %v460 = vunpack.c.1.s8 %v452
        %v461 = vunpack.c.1.s8 %v453
        %v462 = vunpack.c.1.s8 %v454
        %v463 = vunpack.c.1.s8 %v455
        %v464 = vunpack.c.2.s8 %v452
        %v465 = vunpack.c.2.s8 %v453
        %v466 = vunpack.c.2.s8 %v454
        %v467 = vunpack.c.2.s8 %v455
        %v468 = vunpack.c.3.s8 %v452
        %v469 = vunpack.c.3.s8 %v453
        %v470 = vunpack.c.3.s8 %v454
        %v471 = vunpack.c.3.s8 %v455
        %v472 = vpack.c.b16 %v457, %v456
        %v473 = vpack.c.b16 %v459, %v458
        %v474 = vpack.c.b8 %v473, %v472
        %v475 = vpack.c.b16 %v461, %v460
        %v476 = vpack.c.b16 %v463, %v462
        %v477 = vpack.c.b8 %v476, %v475
        %v478 = vpack.c.b16 %v465, %v464
        %v479 = vpack.c.b16 %v467, %v466
        %v480 = vpack.c.b8 %v479, %v478
        %v481 = vpack.c.b16 %v469, %v468
        %v482 = vpack.c.b16 %v471, %v470
        %v483 = vpack.c.b8 %v482, %v481
        %vm484 = vnez %v474
        %vm485 = vnez %v477
        %vm486 = vnez %v480
        %vm487 = vnez %v483
        %v488 = vsel %vm484, 16843009, 0
        %v489 = vsel %vm485, 16843009, 0
        %v490 = vsel %vm486, 16843009, 0
        %v491 = vsel %vm487, 16843009, 0
        %v492 = vunpack.c.0.s8 %v488
        %v493 = vunpack.c.1.s8 %v488
        %v494 = vunpack.c.2.s8 %v488
        %v495 = vunpack.c.3.s8 %v488
        %v496 = vunpack.c.0.s8 %v489
        %v497 = vunpack.c.1.s8 %v489
        %v498 = vunpack.c.2.s8 %v489
        %v499 = vunpack.c.3.s8 %v489
        %v500 = vunpack.c.0.s8 %v490
        %v501 = vunpack.c.1.s8 %v490
        %v502 = vunpack.c.2.s8 %v490
        %v503 = vunpack.c.3.s8 %v490
        %v504 = vunpack.c.0.s8 %v491
        %v505 = vunpack.c.1.s8 %v491
        %v506 = vunpack.c.2.s8 %v491
        %v507 = vunpack.c.3.s8 %v491
        %vm508 = vcmp.ne.s32.totalorder %v492, 0
        %vm509 = vcmp.ne.s32.totalorder %v493, 0
        %vm510 = vcmp.ne.s32.totalorder %v494, 0
        %vm511 = vcmp.ne.s32.totalorder %v495, 0
        %vm512 = vcmp.ne.s32.totalorder %v496, 0
        %vm513 = vcmp.ne.s32.totalorder %v497, 0
        %vm514 = vcmp.ne.s32.totalorder %v498, 0
        %vm515 = vcmp.ne.s32.totalorder %v499, 0
        %vm516 = vcmp.ne.s32.totalorder %v500, 0
        %vm517 = vcmp.ne.s32.totalorder %v501, 0
        %vm518 = vcmp.ne.s32.totalorder %v502, 0
        %vm519 = vcmp.ne.s32.totalorder %v503, 0
        %vm520 = vcmp.ne.s32.totalorder %v504, 0
        %vm521 = vcmp.ne.s32.totalorder %v505, 0
        %vm522 = vcmp.ne.s32.totalorder %v506, 0
        %vm523 = vcmp.ne.s32.totalorder %v507, 0
        %v524 = vsel %vm508, %v428, 0.0
        %v525 = vsel %vm509, %v429, 0.0
        %v526 = vsel %vm510, %v430, 0.0
        %v527 = vsel %vm511, %v431, 0.0
        %v528 = vsel %vm512, %v432, 0.0
        %v529 = vsel %vm513, %v433, 0.0
        %v530 = vsel %vm514, %v434, 0.0
        %v531 = vsel %vm515, %v435, 0.0
        %v532 = vsel %vm516, %v436, 0.0
        %v533 = vsel %vm517, %v437, 0.0
        %v534 = vsel %vm518, %v438, 0.0
        %v535 = vsel %vm519, %v439, 0.0
        %v536 = vsel %vm520, %v440, 0.0
        %v537 = vsel %vm521, %v441, 0.0
        %v538 = vsel %vm522, %v442, 0.0
        %v539 = vsel %vm523, %v443, 0.0
        %v540 = vld [vmem:[#allocation2] sm:$0xff]
        %v541 = vld [vmem:[#allocation2 + $0x8] sm:$0xff]
        %v542 = vld [vmem:[#allocation2 + $0x10] sm:$0xff]
        %v543 = vld [vmem:[#allocation2 + $0x18] sm:$0xff]
        %v544 = vadd.f32 %v524, %v528
        %v545 = vadd.f32 %v544, %v532
        %v546 = vadd.f32 %v545, %v536
        %v547 = vadd.f32 %v525, %v529
        %v548 = vadd.f32 %v547, %v533
        %v549 = vadd.f32 %v548, %v537
        %v550 = vadd.f32 %v526, %v530
        %v551 = vadd.f32 %v550, %v534
        %v552 = vadd.f32 %v551, %v538
        %v553 = vadd.f32 %v527, %v531
        %v554 = vadd.f32 %v553, %v535
        %v555 = vadd.f32 %v554, %v539
        %v556 = vadd.f32 %v540, %v546
        %v557 = vadd.f32 %v541, %v549
        %v558 = vadd.f32 %v542, %v552
        %v559 = vadd.f32 %v543, %v555
        %560 = vst [vmem:[#allocation2] sm:$0xff] %v556
        %561 = vst [vmem:[#allocation2 + $0x8] sm:$0xff] %v557
        %562 = vst [vmem:[#allocation2 + $0x10] sm:$0xff] %v558
        %563 = vst [vmem:[#allocation2 + $0x18] sm:$0xff] %v559
        // Predicated region
        $region49: #{tpu_custom_call.1} parent=31 // pred_check
          %p564 = pneg %p292
        $region50: #{tpu_custom_call.1} parent=31 // pred_check_branch
          %566 = sbr.rel (%p564) target = $region52
        $region51: #{tpu_custom_call.1} parent=31 // pred_region
          %v567 = vld [vmem:[#allocation2] sm:$0xff]
          %v568 = vld [vmem:[#allocation2 + $0x8] sm:$0xff]
          %v569 = vld [vmem:[#allocation2 + $0x10] sm:$0xff]
          %v570 = vld [vmem:[#allocation2 + $0x18] sm:$0xff]
          %v571 = vadd.f32 %v567, %v568
          %v572 = vadd.f32 %v571, %v569
          %v573 = vadd.f32 %v572, %v570
          %574 = vadd.xlane.f32.xlu0 %v573
          %v575 = vpop.xlane.xlu0 %574
          %v576 = vrot.slane %v575, 4
          %v577 = vadd.f32 %v575, %v576
          %v578 = vrot.slane %v577, 2
          %v579 = vadd.f32 %v577, %v578
          %v580 = vrot.slane %v579, 1
          %v581 = vadd.f32 %v579, %v580
          %s582 = vtos %v581
          %v583 = vstv %s582
          %vm584 = vcmask 0
          %585 = vst.msk [vmem:[%s289] sm:$0x1] %vm584, %v583
        $region52: #{tpu_custom_call.1} parent=31 // pred_fallthru
          _
        %p586 = scmp.lt.s32.totalorder %s24, 1
        %s587 = scalar_select %p586, %s24, 1
        %s588 = scalar_lea.vmem %s3, %s587
        // Predicated region
        $region53: #{tpu_custom_call.1} parent=31 // pred_check
          %p589 = pneg %p134
        $region54: #{tpu_custom_call.1} parent=31 // pred_check_branch
          %591 = sbr.rel (%p589) target = $region56
        $region55: #{tpu_custom_call.1} parent=31 // pred_region
          _
        $region56: #{tpu_custom_call.1} parent=31 // pred_fallthru
          _
      $region32: #{tpu_custom_call.1} parent=5 // pred_fallthru
        _
      %p592 = scmp.le.s32.totalorder 2, %s15
      // Predicated region
      $region57: #{tpu_custom_call.1} parent=5 // pred_check
        %p593 = pneg %p592
      $region58: #{tpu_custom_call.1} parent=5 // pred_check_branch
        %595 = sbr.rel (%p593) target = $region60
      $region59: #{tpu_custom_call.1} parent=5 // pred_region
        %s596 = ssub.s32 %s15, 2
        // Predicated region
        $region61: #{tpu_custom_call.1} parent=59 // pred_check
          %p597 = pneg %p140
        $region62: #{tpu_custom_call.1} parent=59 // pred_check_branch
          %599 = sbr.rel (%p597) target = $region64
        $region63: #{tpu_custom_call.1} parent=59 // pred_region
          %p600 = scmp.lt.s32.totalorder %s26, 1
          %s601 = scalar_select %p600, %s26, 1
          %s602 = scalar_lea.vmem %s3, %s601
        $region64: #{tpu_custom_call.1} parent=59 // pred_fallthru
          _
      $region60: #{tpu_custom_call.1} parent=5 // pred_fallthru
        _
    $region6: #{tpu_custom_call.1} parent=1 // loop_footer
      %s19 = sadd.s32 1, %s15
    $region7: #{tpu_custom_call.1} parent=1 // loop_footer_branch
      %14 = sbr.rel target = $region3
    $region8: #{tpu_custom_call.1} parent=1 // loop_exit
      _
    %603 = vsyncpa [#allocation4], 1
    %s604 = scalar_lea.sflag [#allocation4], 1
    %605 = vsyncpa %s604, 1
    %606 = vsyncpa [#allocation6], 1
    %s607 = scalar_lea.sflag [#allocation6], 1
    %608 = vsyncpa %s607, 1

</llo_original>
